<compile_context>
chip_gen: v7x
topology: tpu7x:2x2x1
jax: 0.10.0
libtpu: 0.0.40
codegen_flags: <defaults>
</compile_context>

<pallas_src>
import functools

import jax
import jax.numpy as jnp
from jax.experimental import pallas as pl
from jax.experimental.pallas import tpu as pltpu


def _channelwise_noise_kernel(x_ref, mu_ref, sigma_ref, o_ref, *, epsilon):
    # Elementwise hot path: (x - mu) * rsqrt(sigma^2 + eps), rows broadcast.
    # Compute in f32 (VPU/EUP have huge slack in this memory-bound kernel) and
    # cast only on the final store.
    x = x_ref[...].astype(jnp.float32)          # (tb, D)
    mu = mu_ref[...].astype(jnp.float32)        # (1, D), resident across steps
    sigma = sigma_ref[...].astype(jnp.float32)  # (1, D), resident across steps
    scale = jax.lax.rsqrt(sigma * sigma + jnp.float32(epsilon))
    o_ref[...] = ((x - mu) * scale).astype(o_ref.dtype)


def _sublane_multiple(dtype):
    itemsize = jnp.dtype(dtype).itemsize
    return {4: 8, 2: 16, 1: 32}.get(itemsize, 8)


def _pick_row_tile(B, D, dtype, *,
                   target_tile_bytes=4 << 20,
                   vmem_budget_bytes=24 << 20,
                   min_grid_steps=2):
    """Largest row tile (multiple of the dtype's sublane pack, byte-targeted)
    whose 2x-double-buffered input + output tiles fit a conservative VMEM
    budget, capped so large arrays still get >= 2 grid steps (megacore)."""
    itemsize = jnp.dtype(dtype).itemsize
    sub = _sublane_multiple(dtype)
    row_bytes = max(1, D * itemsize)
    # 2 bufs for the x tile + 2 bufs for the out tile.
    max_rows_by_vmem = max(sub, vmem_budget_bytes // (4 * row_bytes))
    target_rows = max(sub, target_tile_bytes // row_bytes)
    tb = min(target_rows, max_rows_by_vmem, B)
    tb = max(sub, (tb // sub) * sub)
    # Megacore: keep >= min_grid_steps grid steps when the array is big enough
    # for a second TensorCore to matter and B permits it.
    if B * row_bytes >= (1 << 20) and B >= min_grid_steps * sub:
        cap = max(sub, (pl.cdiv(B, min_grid_steps) // sub) * sub)
        tb = min(tb, cap)
    if tb >= B:
        return B  # single full-extent row block (always legal)
    return tb


def channelwise_noise(x, mu, sigma, *, epsilon=1e-5, row_tile=None,
                      donate_x=False):
    """x: (B, D). mu, sigma: (1, D). Returns (x - mu) / sqrt(sigma**2 + eps)."""
    B, D = x.shape
    itemsize = jnp.dtype(x.dtype).itemsize
    sub = _sublane_multiple(x.dtype)

    tb = row_tile if row_tile is not None else _pick_row_tile(B, D, x.dtype)
    if tb < B:
        # (8,128) constraint: row block dim must be a multiple of the sublane
        # pack or equal to the full extent B.
        tb = max(sub, (tb // sub) * sub)
    else:
        tb = B
    grid = (pl.cdiv(B, tb),)  # partial last tile is masked by Pallas

    cost = pl.CostEstimate(
        flops=3 * B * D,                   # sub + mul (+ rsqrt counted below)
        transcendentals=D * grid[0],
        bytes_accessed=(2 * B * D + 2 * D) * itemsize,
    )

    # Only raise the scoped-VMEM limit when the double-buffered footprint gets
    # near v5e's 16 MiB default; otherwise leave the compiler defaults alone.
    footprint = 4 * tb * D * itemsize + 4 * D * itemsize
    compiler_kwargs = dict(dimension_semantics=("parallel",))
    if footprint > (12 << 20):
        compiler_kwargs["vmem_limit_bytes"] = int(
            min(48 << 20, max(32 << 20, 2 * footprint)))

    aliases = {0: 0} if donate_x else {}

    return pl.pallas_call(
        functools.partial(_channelwise_noise_kernel, epsilon=epsilon),
        out_shape=jax.ShapeDtypeStruct((B, D), x.dtype),
        grid=grid,
        in_specs=[
            pl.BlockSpec((tb, D), lambda i: (i, 0)),   # x row-tile
            pl.BlockSpec((1, D), lambda i: (0, 0)),    # mu (resident)
            pl.BlockSpec((1, D), lambda i: (0, 0)),    # sigma (resident)
        ],
        out_specs=pl.BlockSpec((tb, D), lambda i: (i, 0)),
        compiler_params=pltpu.CompilerParams(**compiler_kwargs),
        cost_estimate=cost,
        input_output_aliases=aliases,
    )(x, mu, sigma)


def init_params(d):
    """Parameter init matching the module's __init__ (logvar = 2*log(eye(d)))
    but built without calling log(0), which only emits warnings."""
    mu = jnp.zeros((1, d), dtype=jnp.float32)
    eye = jnp.eye(d, dtype=jnp.float32)
    logvar = jnp.where(eye > 0, jnp.float32(0.0), -jnp.inf)  # == 2*log(eye(d))
    return mu, logvar


def sample_eval(mu, logvar):
    """Eval-mode sample(): returns (mu, diag(exp(0.5 * logvar)))."""
    std = jnp.exp(0.5 * logvar)          # (d, d), identity here
    sigma = jnp.diag(std)[None, :]       # (1, d)
    return mu, sigma


if __name__ == "__main__":
    epsilon = 1e-5
    key = jax.random.PRNGKey(0)
    k1, k2, k3, k4, k5 = jax.random.split(key, 5)

    # Case 1: module-faithful params, multi-step grid with a partial last tile
    # (B=24, row_tile=8 -> grid=(3,)); D=32 is NOT a multiple of 128, so the
    # lane dimension uses full-extent blocks (no pad / slice anywhere).
    B1, D1 = 24, 32
    x1 = jax.random.normal(k1, (B1, D1), dtype=jnp.float32)
    mu1, logvar1 = init_params(D1)
    mu1, sigma1 = sample_eval(mu1, logvar1)
    out1 = jax.block_until_ready(
        channelwise_noise(x1, mu1, sigma1, epsilon=epsilon, row_tile=8))
    ref1 = (x1 - mu1) / jnp.sqrt(sigma1 ** 2 + epsilon)
    assert out1.shape == (B1, D1) and out1.dtype == x1.dtype
    assert jnp.allclose(out1, ref1, atol=1e-5, rtol=1e-5)

    # Case 2: generic mu/sigma, automatic byte-based tile picker (single
    # full-extent tile for this tiny shape), non-128 D again.
    B2, D2 = 40, 96
    x2 = jax.random.normal(k2, (B2, D2), dtype=jnp.float32)
    mu2 = 0.1 * jax.random.normal(k3, (1, D2), dtype=jnp.float32)
    sigma2 = 1.0 + 0.5 * jax.random.uniform(k4, (1, D2), dtype=jnp.float32)
    out2 = jax.block_until_ready(
        channelwise_noise(x2, mu2, sigma2, epsilon=epsilon))
    ref2 = (x2 - mu2) / jnp.sqrt(sigma2 ** 2 + epsilon)
    assert out2.shape == (B2, D2) and out2.dtype == x2.dtype
    assert jnp.allclose(out2, ref2, atol=1e-5, rtol=1e-5)

    # Case 3: bf16 input — dtype-aware sublane rounding (16-row tiles) and
    # f32 internal compute with a cast only on the final store.
    B3, D3 = 32, 128
    x3 = jax.random.normal(k5, (B3, D3), dtype=jnp.float32).astype(jnp.bfloat16)
    mu3, logvar3 = init_params(D3)
    mu3, sigma3 = sample_eval(mu3, logvar3)
    out3 = jax.block_until_ready(
        channelwise_noise(x3, mu3.astype(jnp.bfloat16),
                          sigma3.astype(jnp.bfloat16),
                          epsilon=epsilon, row_tile=16))
    ref3 = ((x3.astype(jnp.float32) - mu3) /
            jnp.sqrt(sigma3 ** 2 + epsilon)).astype(jnp.bfloat16)
    assert out3.shape == (B3, D3) and out3.dtype == jnp.bfloat16
    assert jnp.allclose(out3.astype(jnp.float32), ref3.astype(jnp.float32),
                        atol=2e-2, rtol=2e-2)

    print("KERNEL_OK")
</pallas_src>

<mosaic_0001>
module attributes {stable_mosaic.version = 11 : i64} {
  func.func @_channelwise_noise_kernel(%arg0: i32, %arg1: memref<8x32xf32, #tpu.memory_space<vmem>>, %arg2: memref<1x32xf32, #tpu.memory_space<vmem>>, %arg3: memref<1x32xf32, #tpu.memory_space<vmem>>, %arg4: memref<8x32xf32, #tpu.memory_space<vmem>>) attributes {dimension_semantics = [#tpu.dimension_semantics<parallel>], iteration_bounds = array<i64: 3>, scalar_prefetch = 0 : i64, scratch_operands = 0 : i64, tpu.core_type = #tpu.core_type<tc>, window_params = [{transform_indices = @transform_0, window_bounds = array<i64: 8, 32>}, {pipeline_mode = #tpu.pipeline_mode<synchronous>, transform_indices = @transform_1, window_bounds = array<i64: 1, 32>}, {pipeline_mode = #tpu.pipeline_mode<synchronous>, transform_indices = @transform_2, window_bounds = array<i64: 1, 32>}, {transform_indices = @transform_3, window_bounds = array<i64: 8, 32>}]} {
    %c0 = arith.constant 0 : index
    %c0_0 = arith.constant 0 : index
    %0 = vector.load %arg1[%c0, %c0_0] : memref<8x32xf32, #tpu.memory_space<vmem>>, vector<8x32xf32>
    %c0_1 = arith.constant 0 : index
    %c0_2 = arith.constant 0 : index
    %1 = vector.load %arg2[%c0_1, %c0_2] : memref<1x32xf32, #tpu.memory_space<vmem>>, vector<1x32xf32>
    %c0_3 = arith.constant 0 : index
    %c0_4 = arith.constant 0 : index
    %2 = vector.load %arg3[%c0_3, %c0_4] : memref<1x32xf32, #tpu.memory_space<vmem>>, vector<1x32xf32>
    %3 = arith.mulf %2, %2 : vector<1x32xf32>
    %cst = arith.constant 9.99999974E-6 : f32
    %4 = vector.broadcast %cst : f32 to vector<1x32xf32>
    %5 = arith.addf %3, %4 : vector<1x32xf32>
    %6 = math.rsqrt %5 : vector<1x32xf32>
    %7 = vector.broadcast %1 : vector<1x32xf32> to vector<8x32xf32>
    %8 = arith.subf %0, %7 : vector<8x32xf32>
    %9 = vector.broadcast %6 : vector<1x32xf32> to vector<8x32xf32>
    %10 = arith.mulf %8, %9 : vector<8x32xf32>
    %c0_5 = arith.constant 0 : index
    %c0_6 = arith.constant 0 : index
    %11 = vector.load %arg4[%c0_5, %c0_6] : memref<8x32xf32, #tpu.memory_space<vmem>>, vector<8x32xf32>
    tpu.vector_store %arg4[%c0_5, %c0_6], %10 {strides = array<i32>} : memref<8x32xf32, #tpu.memory_space<vmem>>, vector<8x32xf32>,
    return
  }
  func.func @transform_0(%arg0: i32) -> (i32, i32) {
    %c0_i32 = arith.constant 0 : i32
    %c0_i32_0 = arith.constant 0 : i32
    return %arg0, %c0_i32 : i32, i32
  }
  func.func @transform_1(%arg0: i32) -> (i32, i32) {
    %c0_i32 = arith.constant 0 : i32
    %c0_i32_0 = arith.constant 0 : i32
    %c0_i32_1 = arith.constant 0 : i32
    return %c0_i32, %c0_i32_0 : i32, i32
  }
  func.func @transform_2(%arg0: i32) -> (i32, i32) {
    %c0_i32 = arith.constant 0 : i32
    %c0_i32_0 = arith.constant 0 : i32
    %c0_i32_1 = arith.constant 0 : i32
    return %c0_i32, %c0_i32_0 : i32, i32
  }
  func.func @transform_3(%arg0: i32) -> (i32, i32) {
    %c0_i32 = arith.constant 0 : i32
    %c0_i32_0 = arith.constant 0 : i32
    return %arg0, %c0_i32 : i32, i32
  }
}

</mosaic_0001>

<llo_original>
// kernel: tpu_custom_call.1
$region0: #{tpu_custom_call.1}
  #allocation0 [shape = 'u32[]', space=smem, size = 0x4, offset = 0x4, fixed_abs, tag = 'smem constant byte address 0x4 - core index']
  #allocation1 [shape = 'u32[144,128]{1,0:T(1,128)}', space=vmem, size = 0x12000, scoped, tag = 'internal scratch']
  %s0 = inlined_call_operand.hbm [shape: f32[24,32], index: 0, kind: input, shape index: {}]
  %s1 = inlined_call_operand.vmem [shape: f32[1,32], index: 1, kind: input, shape index: {}]
  %s2 = inlined_call_operand.vmem [shape: f32[1,32], index: 2, kind: input, shape index: {}]
  %s3 = inlined_call_operand.hbm [shape: f32[24,32], index: 3, kind: output, shape index: {}]
  %s4 = sld [smem:[#allocation0]]
  $region49: #{tpu_custom_call.1} parent=0
    _
  %s6 = ssub.s32 1, %s4
  %s7 = scalar_select 0, %s6, %s4
  $region1: #{tpu_custom_call.1} parent=0
    #allocation2 [shape = 'u8[8192]{0}', space=vmem, size = 0x2000, scoped, tag = 'input window, operand 0']
    #allocation3 [shape = 's32[2]{0}', space=sflag, size = 0x8, scoped, tag = 'scoped memory for tpu_custom_call.1']
    #allocation4 [shape = 's32[2]{0}', space=sflag, size = 0x8, scoped, tag = 'scoped memory for tpu_custom_call.1']
    #allocation5 [shape = 'u8[8192]{0}', space=vmem, size = 0x2000, scoped, tag = 'output window, operand 0']
    %8 = vsyncpa [#allocation3], 0
    %s9 = scalar_lea.sflag [#allocation3], 1
    %10 = vsyncpa %s9, 0
    %11 = vsyncpa [#allocation4], 0
    %s12 = scalar_lea.sflag [#allocation4], 1
    %13 = vsyncpa %s12, 0
    loop: start=0, step=1, limit=5
    $region2: #{tpu_custom_call.1} parent=1 // loop_pre_header
      _
    $region3: #{tpu_custom_call.1} parent=1 // loop_header
      %s15 = sphi 0, %s19
      %p16 = scmp.ge.s32.totalorder %s15, 5
      %s25 = sphi 0, %s27
      %s28 = sphi 0, %s25
      %s29 = sphi 0, %s28
      %s45 = sphi 0, %s29
      %s49 = sphi 0, %s49
      %s51 = sphi 0, %s49
      %s52 = sphi 0, %s51
      %s66 = sphi 0, %s52
      %s70 = sphi 0, %s70
      %s72 = sphi 0, %s70
      %s73 = sphi 0, %s72
      %s87 = sphi 0, %s73
      %s93 = sphi 0, %s95
      %s96 = sphi 0, %s93
      %s97 = sphi 0, %s96
      %s113 = sphi 0, %s97
    $region4: #{tpu_custom_call.1} parent=1 // loop_header_branch
      %18 = sbr.rel (%p16) target = $region8
    $region5: #{tpu_custom_call.1} parent=1 // loop_body
      %s20 = ssub.s32 %s15, 1
      %s21 = ssub.s32 %s15, 2
      %s22 = sadd.s32 %s15, 1
      %s23 = ssub.s32 %s15, %s22
      %p24 = scmp.eq.s32.totalorder %s23, 0
      %s26 = sadd.s32 %s25, 1
      %s27 = scalar_select %p24, %s25, %s26
      %p30 = pneg %p24
      %p31 = scmp.eq.s32.totalorder %s15, 2
      %p32 = por %p30, %p31
      %p33 = scmp.ne.s32.totalorder %s25, %s28
      %p34 = scmp.eq.s32.totalorder %s15, 0
      %p35 = por %p33, %p34
      %p36 = scmp.ne.s32.totalorder %s25, %s28
      %p37 = scmp.eq.s32.totalorder %s20, 2
      %p38 = por %p36, %p37
      %p39 = scmp.ne.s32.totalorder %s28, %s29
      %p40 = scmp.eq.s32.totalorder %s20, 0
      %p41 = por %p39, %p40
      %p42 = scmp.ne.s32.totalorder %s28, %s29
      %p43 = scmp.eq.s32.totalorder %s21, 2
      %p44 = por %p42, %p43
      %p46 = scmp.ne.s32.totalorder %s29, %s45
      %p47 = scmp.eq.s32.totalorder %s21, 0
      %p48 = por %p46, %p47
      %s50 = sadd.s32 %s49, 1
      %p53 = scmp.eq.s32.totalorder %s15, 2
      %p54 = scmp.ne.s32.totalorder %s49, %s51
      %p55 = scmp.eq.s32.totalorder %s15, 0
      %p56 = por %p54, %p55
      %p57 = scmp.ne.s32.totalorder %s49, %s51
      %p58 = scmp.eq.s32.totalorder %s20, 2
      %p59 = por %p57, %p58
      %p60 = scmp.ne.s32.totalorder %s51, %s52
      %p61 = scmp.eq.s32.totalorder %s20, 0
      %p62 = por %p60, %p61
      %p63 = scmp.ne.s32.totalorder %s51, %s52
      %p64 = scmp.eq.s32.totalorder %s21, 2
      %p65 = por %p63, %p64
      %p67 = scmp.ne.s32.totalorder %s52, %s66
      %p68 = scmp.eq.s32.totalorder %s21, 0
      %p69 = por %p67, %p68
      %s71 = sadd.s32 %s70, 1
      %p74 = scmp.eq.s32.totalorder %s15, 2
      %p75 = scmp.ne.s32.totalorder %s70, %s72
      %p76 = scmp.eq.s32.totalorder %s15, 0
      %p77 = por %p75, %p76
      %p78 = scmp.ne.s32.totalorder %s70, %s72
      %p79 = scmp.eq.s32.totalorder %s20, 2
      %p80 = por %p78, %p79
      %p81 = scmp.ne.s32.totalorder %s72, %s73
      %p82 = scmp.eq.s32.totalorder %s20, 0
      %p83 = por %p81, %p82
      %p84 = scmp.ne.s32.totalorder %s72, %s73
      %p85 = scmp.eq.s32.totalorder %s21, 2
      %p86 = por %p84, %p85
      %p88 = scmp.ne.s32.totalorder %s73, %s87
      %p89 = scmp.eq.s32.totalorder %s21, 0
      %p90 = por %p88, %p89
      %s91 = ssub.s32 %s15, %s22
      %p92 = scmp.eq.s32.totalorder %s91, 0
      %s94 = sadd.s32 %s93, 1
      %s95 = scalar_select %p92, %s93, %s94
      %p98 = pneg %p92
      %p99 = scmp.eq.s32.totalorder %s15, 2
      %p100 = por %p98, %p99
      %p101 = scmp.ne.s32.totalorder %s93, %s96
      %p102 = scmp.eq.s32.totalorder %s15, 0
      %p103 = por %p101, %p102
      %p104 = scmp.ne.s32.totalorder %s93, %s96
      %p105 = scmp.eq.s32.totalorder %s20, 2
      %p106 = por %p104, %p105
      %p107 = scmp.ne.s32.totalorder %s96, %s97
      %p108 = scmp.eq.s32.totalorder %s20, 0
      %p109 = por %p107, %p108
      %p110 = scmp.ne.s32.totalorder %s96, %s97
      %p111 = scmp.eq.s32.totalorder %s21, 2
      %p112 = por %p110, %p111
      %p114 = scmp.ne.s32.totalorder %s97, %s113
      %p115 = scmp.eq.s32.totalorder %s21, 0
      %p116 = por %p114, %p115
      %p117 = scmp.le.s32.totalorder 1, %s15
      %p118 = scmp.lt.s32.totalorder %s15, 4
      %p119 = pnand %p117, %p118
      %p120 = pneg %p119
      // Predicated region
      $region9: #{tpu_custom_call.1} parent=5 // pred_check
        _
      $region10: #{tpu_custom_call.1} parent=5 // pred_check_branch
        %122 = sbr.rel (%p119) target = $region12
      $region11: #{tpu_custom_call.1} parent=5 // pred_region
        %s123 = ssub.s32 %s15, 1
        // Predicated region
        $region13: #{tpu_custom_call.1} parent=11 // pred_check
          %p124 = pneg %p62
        $region14: #{tpu_custom_call.1} parent=11 // pred_check_branch
          %126 = sbr.rel (%p124) target = $region16
        $region15: #{tpu_custom_call.1} parent=11 // pred_region
          _
        $region16: #{tpu_custom_call.1} parent=11 // pred_fallthru
          _
        // Predicated region
        $region17: #{tpu_custom_call.1} parent=11 // pred_check
          %p127 = pneg %p83
        $region18: #{tpu_custom_call.1} parent=11 // pred_check_branch
          %129 = sbr.rel (%p127) target = $region20
        $region19: #{tpu_custom_call.1} parent=11 // pred_region
          _
        $region20: #{tpu_custom_call.1} parent=11 // pred_fallthru
          _
      $region12: #{tpu_custom_call.1} parent=5 // pred_fallthru
        _
      %p130 = scmp.lt.s32.totalorder %s15, 3
      // Predicated region
      $region21: #{tpu_custom_call.1} parent=5 // pred_check
        %p131 = pneg %p130
      $region22: #{tpu_custom_call.1} parent=5 // pred_check_branch
        %133 = sbr.rel (%p131) target = $region24
      $region23: #{tpu_custom_call.1} parent=5 // pred_region
        // Predicated region
        $region25: #{tpu_custom_call.1} parent=23 // pred_check
          %p134 = pneg %p35
        $region26: #{tpu_custom_call.1} parent=23 // pred_check_branch
          %136 = sbr.rel (%p134) target = $region28
        $region27: #{tpu_custom_call.1} parent=23 // pred_region
          %s137 = sand.u32 %s25, 1
          %s138 = scalar_lea.sflag [#allocation3], %s137
          %s139 = sand.u32 %s25, 1
          %s140 = smul.addr %s139, 8
          %s141 = scalar_lea.vmem [#allocation2], %s140
          %s143 = ssub.s32 128, 128
          %144 = vsyncadd %s138, %s143
          %s145 = smul.addr %s15, 128
          %s146 = scalar_lea.hbm %s0, %s145
          %s148 = sshll.u32 %s141, 4
          %s149 = int_to_ptr.vmem [resolvable:$true] %s148
          %151 = dma.hbm_to_vmem [thread:$0]  %s146, 128, %s149, %s138
        $region28: #{tpu_custom_call.1} parent=23 // pred_fallthru
          _
      $region24: #{tpu_custom_call.1} parent=5 // pred_fallthru
        _
      %p152 = scmp.le.s32.totalorder 1, %s15
      %p153 = scmp.lt.s32.totalorder %s15, 4
      %p154 = pnand %p152, %p153
      %p155 = pneg %p154
      // Predicated region
      $region29: #{tpu_custom_call.1} parent=5 // pred_check
        _
      $region30: #{tpu_custom_call.1} parent=5 // pred_check_branch
        %157 = sbr.rel (%p154) target = $region32
      $region31: #{tpu_custom_call.1} parent=5 // pred_region
        %s158 = ssub.s32 %s15, 1
        %s159 = sand.u32 %s28, 1
        %s160 = scalar_lea.sflag [#allocation3], %s159
        %s161 = sand.u32 %s28, 1
        %s162 = smul.addr %s161, 8
        %s163 = scalar_lea.vmem [#allocation2], %s162
        // Predicated region
        $region33: #{tpu_custom_call.1} parent=31 // pred_check
          %p164 = pneg %p41
        $region34: #{tpu_custom_call.1} parent=31 // pred_check_branch
          %166 = sbr.rel (%p164) target = $region36
        $region35: #{tpu_custom_call.1} parent=31 // pred_region
          %167 = dma.done %s160, 128
        $region36: #{tpu_custom_call.1} parent=31 // pred_fallthru
          _
        %s168 = sand.u32 %s28, 1
        %s169 = scalar_lea.sflag [#allocation3], %s168
        %s170 = sand.u32 %s28, 1
        %s171 = smul.addr %s170, 8
        %s172 = scalar_lea.vmem [#allocation2], %s171
        %p173 = pneg %p41
        %p174 = pneg %p38
        %p175 = pneg %p62
        %p176 = pneg %p59
        %p177 = pneg %p83
        %p178 = pneg %p80
        %p179 = pneg %p109
        %p180 = pneg %p106
        %s181 = sand.u32 %s96, 1
        %s182 = scalar_lea.sflag [#allocation4], %s181
        %s183 = sand.u32 %s96, 1
        %s184 = smul.addr %s183, 8
        %s185 = scalar_lea.vmem [#allocation5], %s184
        %v186 = vld [vmem:[%s163] sm:$0xff]
        %v187 = vld [vmem:[%s1] sm:$0x1]
        %v188 = vld [vmem:[%s2] sm:$0x1]
        %v189 = vmul.f32 %v188, %v188
        %v190 = vadd.f32 %v189, 1e-05
        %v191 = vrsqrt.pop %v190
        %v193 = vlaneseq
        %v194 = vshrl.u32 %v193, 7
        %v195 = vsub.s32 0, %v194
        %v196 = vrot.slane %v187, %v195
        %v198 = vsub.f32 %v186, %v196
        %v200 = vlaneseq
        %v201 = vshrl.u32 %v200, 7
        %v202 = vsub.s32 0, %v201
        %v203 = vrot.slane %v191, %v202
        %v205 = vmul.f32 %v198, %v203
        %vm206 = vcmask 261120
        %207 = vst.msk [vmem:[%s185] sm:$0xff] %vm206, %v205
        %s208 = sand.u32 %s96, 1
        %s209 = scalar_lea.sflag [#allocation4], %s208
        %s210 = sand.u32 %s96, 1
        %s211 = smul.addr %s210, 8
        %s212 = scalar_lea.vmem [#allocation5], %s211
        // Predicated region
        $region37: #{tpu_custom_call.1} parent=31 // pred_check
          %p213 = pneg %p106
        $region38: #{tpu_custom_call.1} parent=31 // pred_check_branch
          %215 = sbr.rel (%p213) target = $region40
        $region39: #{tpu_custom_call.1} parent=31 // pred_region
          %s217 = ssub.s32 128, 128
          %218 = vsyncadd %s209, %s217
          %s219 = smul.addr %s20, 128
          %s220 = scalar_lea.hbm %s3, %s219
          %s222 = sshll.u32 %s212, 4
          %s223 = int_to_ptr.vmem [resolvable:$true] %s222
          %225 = dma.vmem_to_hbm [thread:$0]  %s223, 128, %s220, %s209
        $region40: #{tpu_custom_call.1} parent=31 // pred_fallthru
          _
      $region32: #{tpu_custom_call.1} parent=5 // pred_fallthru
        _
      %p226 = scmp.le.s32.totalorder 2, %s15
      // Predicated region
      $region41: #{tpu_custom_call.1} parent=5 // pred_check
        %p227 = pneg %p226
      $region42: #{tpu_custom_call.1} parent=5 // pred_check_branch
        %229 = sbr.rel (%p227) target = $region44
      $region43: #{tpu_custom_call.1} parent=5 // pred_region
        %s230 = ssub.s32 %s15, 2
        // Predicated region
        $region45: #{tpu_custom_call.1} parent=43 // pred_check
          %p231 = pneg %p112
        $region46: #{tpu_custom_call.1} parent=43 // pred_check_branch
          %233 = sbr.rel (%p231) target = $region48
        $region47: #{tpu_custom_call.1} parent=43 // pred_region
          %s234 = sand.u32 %s97, 1
          %s235 = scalar_lea.sflag [#allocation4], %s234
          %s236 = sand.u32 %s97, 1
          %s237 = smul.addr %s236, 8
          %s238 = scalar_lea.vmem [#allocation5], %s237
          %239 = dma.done %s235, 128
        $region48: #{tpu_custom_call.1} parent=43 // pred_fallthru
          _
      $region44: #{tpu_custom_call.1} parent=5 // pred_fallthru
        _
    $region6: #{tpu_custom_call.1} parent=1 // loop_footer
      %s19 = sadd.s32 1, %s15
    $region7: #{tpu_custom_call.1} parent=1 // loop_footer_branch
      %14 = sbr.rel target = $region3
    $region8: #{tpu_custom_call.1} parent=1 // loop_exit
      _
    %240 = vsyncpa [#allocation3], 1
    %s241 = scalar_lea.sflag [#allocation3], 1
    %242 = vsyncpa %s241, 1
    %243 = vsyncpa [#allocation4], 1
    %s244 = scalar_lea.sflag [#allocation4], 1
    %245 = vsyncpa %s244, 1

</llo_original>
